<compile_context>
chip_gen: v5e
topology: v5e:2x2
jax: 0.10.0
libtpu: 0.0.40
codegen_flags: <defaults>
</compile_context>

<pallas_src>
import jax
import jax.numpy as jnp
from jax.experimental import pallas as pl
from jax.experimental.pallas import tpu as pltpu


def mode_fusion_kernel(vid_ref, phys_ref, w1_ref, w2_ref, b_ref, out_ref):
    # out = vid @ (Wv @ Wc_v) + phys @ (Wp @ Wc_p) + fused_bias
    acc = jnp.dot(vid_ref[...], w1_ref[...], preferred_element_type=jnp.float32)
    acc = acc + jnp.dot(phys_ref[...], w2_ref[...],
                        preferred_element_type=jnp.float32)
    acc = acc + b_ref[...]                     # (1, N) broadcast over the tile
    out_ref[...] = acc.astype(out_ref.dtype)


def mode_fusion_forward(vid_x, phys_x, params, *,
                        tm_max=512,
                        compute_dtype=jnp.bfloat16,
                        out_dtype=jnp.float32,   # bf16 also fine if only logits/argmax needed
                        vmem_budget_bytes=32 * 1024 * 1024):
    """Fused ModeFusion forward on TPU via a batch-gridded Pallas kernel."""
    wv, bv, wp, bp, wc_v, wc_p, bc = params

    B, d_vid = vid_x.shape
    d_phys = phys_x.shape[1]
    num_label = wc_v.shape[1]

    # ----------------- host-side prep (exact, f32, weight-sized) -----------------
    n_pad = pl.cdiv(num_label, 128) * 128            # lane-dense output width
    pad_n = n_pad - num_label

    bv2 = bv.reshape(1, -1).astype(jnp.float32)
    bp2 = bp.reshape(1, -1).astype(jnp.float32)
    bc2 = bc.reshape(1, -1).astype(jnp.float32)
    wc_v32 = wc_v.astype(jnp.float32)
    wc_p32 = wc_p.astype(jnp.float32)

    # Pre-compose the two affine stages; keep the composition in f32 and only
    # cast the final MXU operands to bf16.
    w1 = jnp.pad(wv.astype(jnp.float32) @ wc_v32, ((0, 0), (0, pad_n)))
    w2 = jnp.pad(wp.astype(jnp.float32) @ wc_p32, ((0, 0), (0, pad_n)))
    b_fused = jnp.pad(bv2 @ wc_v32 + bp2 @ wc_p32 + bc2, ((0, 0), (0, pad_n)))

    w1 = w1.astype(compute_dtype)
    w2 = w2.astype(compute_dtype)
    # In a real pipeline the producer would already emit bf16 activations;
    # under jit this is a cheap fused elementwise cast.
    vid_x = vid_x.astype(compute_dtype)
    phys_x = phys_x.astype(compute_dtype)

    # ----------------- tile selection / VMEM budgeting -----------------
    act_itemsize = jnp.dtype(compute_dtype).itemsize
    out_itemsize = jnp.dtype(out_dtype).itemsize
    # Resident (single-buffered) weights + fused bias.
    weight_bytes = (d_vid + d_phys) * n_pad * act_itemsize + n_pad * 4
    # Per batch-row: double-buffered activation tiles + double-buffered output tile.
    per_row = 2 * (d_vid + d_phys) * act_itemsize + 2 * n_pad * out_itemsize
    avail = max(vmem_budget_bytes - weight_bytes, 8 * per_row)
    tm_fit = max(8, int(avail // per_row) // 8 * 8)
    tm = min(tm_max, tm_fit, ((B + 7) // 8) * 8)
    if B >= 16:
        # Guarantee >= 2 grid steps so the "parallel" batch axis can be
        # sharded across v7x's two TensorCores.
        tm = min(tm, ((pl.cdiv(B, 2) + 7) // 8) * 8)
    tm = max(8, (tm // 8) * 8)
    nb = pl.cdiv(B, tm)          # ragged last tile handled by Pallas (no host pad)

    vmem_needed = weight_bytes + tm * per_row
    vmem_limit = int(min(max(2 * vmem_needed, 16 * 1024 * 1024),
                         48 * 1024 * 1024))          # fits v7x's 64 MiB physical

    resident = dict(pipeline_mode=pl.Buffered(1))    # loaded once, never re-DMA'd

    out_full = pl.pallas_call(
        mode_fusion_kernel,
        out_shape=jax.ShapeDtypeStruct((B, n_pad), out_dtype),
        grid=(nb,),
        in_specs=[
            # activations: tiled along batch, auto double-buffered pipeline
            pl.BlockSpec((tm, d_vid), lambda i: (i, 0)),
            pl.BlockSpec((tm, d_phys), lambda i: (i, 0)),
            # pre-composed weights / fused bias: constant index_map, VMEM-resident,
            # single-buffered
            pl.BlockSpec((d_vid, n_pad), lambda i: (0, 0), **resident),
            pl.BlockSpec((d_phys, n_pad), lambda i: (0, 0), **resident),
            pl.BlockSpec((1, n_pad), lambda i: (0, 0), **resident),
        ],
        out_specs=pl.BlockSpec((tm, n_pad), lambda i: (i, 0)),
        compiler_params=pltpu.CompilerParams(
            dimension_semantics=("parallel",),
            vmem_limit_bytes=vmem_limit),
    )(vid_x, phys_x, w1, w2, b_fused)

    # Strip lane padding outside the kernel.
    return out_full[:, :num_label]


def init_params(key, d_vid, d_phys, out1_dim, out2_dim, num_label):
    """Deterministic synthetic parameter init (uniform, like PyTorch default)."""
    ks = jax.random.split(key, 6)

    def lin(kw, kb, fan_in, fan_out):
        bound = 1.0 / jnp.sqrt(float(fan_in))
        w = jax.random.uniform(kw, (fan_in, fan_out), jnp.float32, -bound, bound)
        b = jax.random.uniform(kb, (1, fan_out), jnp.float32, -bound, bound)
        return w, b

    wv, bv = lin(ks[0], ks[1], d_vid, out1_dim)                  # video_model Linear
    wp, bp = lin(ks[2], ks[3], d_phys, out2_dim)                 # phys_model Linear
    wc, bc = lin(ks[4], ks[5], out1_dim + out2_dim, num_label)   # combine Linear
    wc_v = wc[:out1_dim, :]
    wc_p = wc[out1_dim:, :]
    return (wv, bv, wp, bp, wc_v, wc_p, bc)


def reference_forward(vid_x, phys_x, params):
    wv, bv, wp, bp, wc_v, wc_p, bc = params
    out_vid = vid_x @ wv + bv
    out_phys = phys_x @ wp + bp
    cat = jnp.concatenate([out_vid, out_phys], axis=1)
    wc = jnp.concatenate([wc_v, wc_p], axis=0)
    return cat @ wc + bc


if __name__ == "__main__":
    # Small shapes consistent with the module's forward.
    B, D_VID, D_PHYS = 8, 32, 16
    OUT1, OUT2, NUM_LABEL = 16, 8, 4

    key = jax.random.PRNGKey(0)
    k_vid, k_phys, k_params = jax.random.split(key, 3)

    vid_x = jax.random.normal(k_vid, (B, D_VID), jnp.float32)
    phys_x = jax.random.normal(k_phys, (B, D_PHYS), jnp.float32)
    params = init_params(k_params, D_VID, D_PHYS, OUT1, OUT2, NUM_LABEL)

    out = mode_fusion_forward(vid_x, phys_x, params)
    out = jax.block_until_ready(out)

    ref = reference_forward(vid_x, phys_x, params)
    assert out.shape == (B, NUM_LABEL)
    # bf16 MXU operands (f32 accumulation) vs a pure-f32 reference -> relaxed tol.
    assert jnp.allclose(out, ref, atol=3e-2, rtol=3e-2), "mismatch vs JAX reference"

    # predict() equivalent (argmax over last dim) kept as plain JAX glue.
    _ = jnp.argmax(out, axis=-1)

    print("KERNEL_OK")
</pallas_src>

<mosaic_0001>
module attributes {stable_mosaic.version = 11 : i64} {
  func.func @mode_fusion_kernel(%arg0: i32, %arg1: memref<8x32xbf16, #tpu.memory_space<vmem>>, %arg2: memref<8x16xbf16, #tpu.memory_space<vmem>>, %arg3: memref<32x128xbf16, #tpu.memory_space<vmem>>, %arg4: memref<16x128xbf16, #tpu.memory_space<vmem>>, %arg5: memref<1x128xf32, #tpu.memory_space<vmem>>, %arg6: memref<8x128xf32, #tpu.memory_space<vmem>>) attributes {dimension_semantics = [#tpu.dimension_semantics<parallel>], iteration_bounds = array<i64: 1>, scalar_prefetch = 0 : i64, scratch_operands = 0 : i64, tpu.core_type = #tpu.core_type<tc>, window_params = [{transform_indices = @transform_0, window_bounds = array<i64: 8, 32>}, {transform_indices = @transform_1, window_bounds = array<i64: 8, 16>}, {pipeline_mode = #tpu.pipeline_mode<synchronous>, transform_indices = @transform_2, window_bounds = array<i64: 32, 128>}, {pipeline_mode = #tpu.pipeline_mode<synchronous>, transform_indices = @transform_3, window_bounds = array<i64: 16, 128>}, {pipeline_mode = #tpu.pipeline_mode<synchronous>, transform_indices = @transform_4, window_bounds = array<i64: 1, 128>}, {transform_indices = @transform_5, window_bounds = array<i64: 8, 128>}]} {
    %c0 = arith.constant 0 : index
    %c0_0 = arith.constant 0 : index
    %0 = vector.load %arg1[%c0, %c0_0] : memref<8x32xbf16, #tpu.memory_space<vmem>>, vector<8x32xbf16>
    %c0_1 = arith.constant 0 : index
    %c0_2 = arith.constant 0 : index
    %1 = vector.load %arg3[%c0_1, %c0_2] : memref<32x128xbf16, #tpu.memory_space<vmem>>, vector<32x128xbf16>
    %cst = arith.constant dense<0.000000e+00> : vector<8x128xf32>
    %2 = tpu.matmul %0, %1, %cst {dimension_numbers = #tpu.dot_dimension_numbers<[1], [0], [0], [1], [0, 0, 1, 1], [], []>} : vector<8x32xbf16>, vector<32x128xbf16>, vector<8x128xf32> -> vector<8x128xf32>
    %c0_3 = arith.constant 0 : index
    %c0_4 = arith.constant 0 : index
    %3 = vector.load %arg2[%c0_3, %c0_4] : memref<8x16xbf16, #tpu.memory_space<vmem>>, vector<8x16xbf16>
    %c0_5 = arith.constant 0 : index
    %c0_6 = arith.constant 0 : index
    %4 = vector.load %arg4[%c0_5, %c0_6] : memref<16x128xbf16, #tpu.memory_space<vmem>>, vector<16x128xbf16>
    %cst_7 = arith.constant dense<0.000000e+00> : vector<8x128xf32>
    %5 = tpu.matmul %3, %4, %cst_7 {dimension_numbers = #tpu.dot_dimension_numbers<[1], [0], [0], [1], [0, 0, 1, 1], [], []>} : vector<8x16xbf16>, vector<16x128xbf16>, vector<8x128xf32> -> vector<8x128xf32>
    %6 = arith.addf %2, %5 : vector<8x128xf32>
    %c0_8 = arith.constant 0 : index
    %c0_9 = arith.constant 0 : index
    %7 = vector.load %arg5[%c0_8, %c0_9] : memref<1x128xf32, #tpu.memory_space<vmem>>, vector<1x128xf32>
    %8 = vector.broadcast %7 : vector<1x128xf32> to vector<8x128xf32>
    %9 = arith.addf %6, %8 : vector<8x128xf32>
    %c0_10 = arith.constant 0 : index
    %c0_11 = arith.constant 0 : index
    %10 = vector.load %arg6[%c0_10, %c0_11] : memref<8x128xf32, #tpu.memory_space<vmem>>, vector<8x128xf32>
    tpu.vector_store %arg6[%c0_10, %c0_11], %9 {strides = array<i32>} : memref<8x128xf32, #tpu.memory_space<vmem>>, vector<8x128xf32>,
    return
  }
  func.func @transform_0(%arg0: i32) -> (i32, i32) {
    %c0_i32 = arith.constant 0 : i32
    %c0_i32_0 = arith.constant 0 : i32
    return %arg0, %c0_i32 : i32, i32
  }
  func.func @transform_1(%arg0: i32) -> (i32, i32) {
    %c0_i32 = arith.constant 0 : i32
    %c0_i32_0 = arith.constant 0 : i32
    return %arg0, %c0_i32 : i32, i32
  }
  func.func @transform_2(%arg0: i32) -> (i32, i32) {
    %c0_i32 = arith.constant 0 : i32
    %c0_i32_0 = arith.constant 0 : i32
    %c0_i32_1 = arith.constant 0 : i32
    return %c0_i32, %c0_i32_0 : i32, i32
  }
  func.func @transform_3(%arg0: i32) -> (i32, i32) {
    %c0_i32 = arith.constant 0 : i32
    %c0_i32_0 = arith.constant 0 : i32
    %c0_i32_1 = arith.constant 0 : i32
    return %c0_i32, %c0_i32_0 : i32, i32
  }
  func.func @transform_4(%arg0: i32) -> (i32, i32) {
    %c0_i32 = arith.constant 0 : i32
    %c0_i32_0 = arith.constant 0 : i32
    %c0_i32_1 = arith.constant 0 : i32
    return %c0_i32, %c0_i32_0 : i32, i32
  }
  func.func @transform_5(%arg0: i32) -> (i32, i32) {
    %c0_i32 = arith.constant 0 : i32
    %c0_i32_0 = arith.constant 0 : i32
    return %arg0, %c0_i32 : i32, i32
  }
}

</mosaic_0001>

<llo_original>
// kernel: tpu_custom_call.1
$region0: #{tpu_custom_call.1}
  #allocation0 [shape = 'u32[]', space=smem, size = 0x4, offset = 0x4, fixed_abs, tag = 'smem constant byte address 0x4 - core index']
  #allocation1 [shape = 'u32[72,128]{1,0:T(1,128)}', space=vmem, size = 0x9000, scoped, tag = 'internal scratch']
  %s0 = inlined_call_operand.hbm [shape: bf16[8,32], index: 0, kind: input, shape index: {}]
  %s1 = inlined_call_operand.hbm [shape: bf16[8,16], index: 1, kind: input, shape index: {}]
  %s2 = inlined_call_operand.hbm [shape: bf16[32,128], index: 2, kind: input, shape index: {}]
  %s3 = inlined_call_operand.hbm [shape: bf16[16,128], index: 3, kind: input, shape index: {}]
  %s4 = inlined_call_operand.vmem [shape: f32[1,128], index: 4, kind: input, shape index: {}]
  %s5 = inlined_call_operand.hbm [shape: f32[8,128], index: 5, kind: output, shape index: {}]
  %s6 = sld [smem:[#allocation0]]
  $region46: #{tpu_custom_call.1} parent=0
    _
  %s8 = ssub.s32 1, %s6
  %s9 = scalar_select 0, %s8, %s6
  $region1: #{tpu_custom_call.1} parent=0
    #allocation2 [shape = 'u8[2048]{0}', space=vmem, size = 0x800, scoped, tag = 'input window, operand 0, single buffered']
    #allocation3 [shape = 's32[1]{0}', space=sflag, size = 0x4, scoped, tag = 'scoped memory for tpu_custom_call.1']
    #allocation4 [shape = 's32[1]{0}', space=sflag, size = 0x4, scoped, tag = 'scoped memory for tpu_custom_call.1']
    #allocation5 [shape = 'u8[2048]{0}', space=vmem, size = 0x800, scoped, tag = 'input window, operand 1, single buffered']
    #allocation6 [shape = 's32[1]{0}', space=sflag, size = 0x4, scoped, tag = 'scoped memory for tpu_custom_call.1']
    #allocation7 [shape = 'u8[8192]{0}', space=vmem, size = 0x2000, scoped, tag = 'input window, operand 2, single buffered']
    #allocation8 [shape = 'u8[4096]{0}', space=vmem, size = 0x1000, scoped, tag = 'input window, operand 3, single buffered']
    #allocation9 [shape = 's32[1]{0}', space=sflag, size = 0x4, scoped, tag = 'scoped memory for tpu_custom_call.1']
    #allocation10 [shape = 'u8[4096]{0}', space=vmem, size = 0x1000, scoped, tag = 'output window, operand 0, single buffered']
    %10 = vsyncpa [#allocation3], 0
    %11 = vsyncpa [#allocation6], 0
    %12 = vsyncpa [#allocation9], 0
    %13 = vsyncpa [#allocation4], 0
    // Predicated region
    $region2: #{tpu_custom_call.1} parent=1 // pred_check
      _
    $region3: #{tpu_custom_call.1} parent=1 // pred_check_branch
      %15 = sbr.rel (0) target = $region5
    $region4: #{tpu_custom_call.1} parent=1 // pred_region
      %17 = vsyncadd [#allocation3], 0
      %s19 = sshll.u32 %s0, 4
      %s20 = int_to_ptr.hbm [resolvable:$true] %s19
      %s21 = sshll.u32 [#allocation2], 4
      %s22 = int_to_ptr.vmem [resolvable:$true] %s21
      %24 = dma.hbm_to_vmem [thread:$0]  %s20, 64, %s22, [#allocation3]
    $region5: #{tpu_custom_call.1} parent=1 // pred_fallthru
      _
    // Predicated region
    $region6: #{tpu_custom_call.1} parent=1 // pred_check
      _
    $region7: #{tpu_custom_call.1} parent=1 // pred_check_branch
      %26 = sbr.rel (0) target = $region9
    $region8: #{tpu_custom_call.1} parent=1 // pred_region
      %28 = vsyncadd [#allocation6], 0
      %s30 = sshll.u32 %s1, 4
      %s31 = int_to_ptr.hbm [resolvable:$true] %s30
      %s32 = sshll.u32 [#allocation5], 4
      %s33 = int_to_ptr.vmem [resolvable:$true] %s32
      %35 = dma.hbm_to_vmem [thread:$0]  %s31, 64, %s33, [#allocation6]
    $region9: #{tpu_custom_call.1} parent=1 // pred_fallthru
      _
    // Predicated region
    $region10: #{tpu_custom_call.1} parent=1 // pred_check
      _
    $region11: #{tpu_custom_call.1} parent=1 // pred_check_branch
      %37 = sbr.rel (0) target = $region13
    $region12: #{tpu_custom_call.1} parent=1 // pred_region
      %39 = vsyncadd [#allocation6], 0
      %s40 = sshll.u32 %s2, 4
      %s41 = int_to_ptr.hbm [resolvable:$true] %s40
      %s42 = sshll.u32 [#allocation7], 4
      %s43 = int_to_ptr.vmem [resolvable:$true] %s42
      %48 = dma.hbm_to_vmem [thread:$0]  %s41, 256, %s43, [#allocation6], 64, 64, 4
    $region13: #{tpu_custom_call.1} parent=1 // pred_fallthru
      _
    // Predicated region
    $region14: #{tpu_custom_call.1} parent=1 // pred_check
      _
    $region15: #{tpu_custom_call.1} parent=1 // pred_check_branch
      %50 = sbr.rel (0) target = $region17
    $region16: #{tpu_custom_call.1} parent=1 // pred_region
      %52 = vsyncadd [#allocation9], 0
      %s53 = sshll.u32 %s3, 4
      %s54 = int_to_ptr.hbm [resolvable:$true] %s53
      %s55 = sshll.u32 [#allocation8], 4
      %s56 = int_to_ptr.vmem [resolvable:$true] %s55
      %61 = dma.hbm_to_vmem [thread:$0]  %s54, 128, %s56, [#allocation9], 64, 64, 4
    $region17: #{tpu_custom_call.1} parent=1 // pred_fallthru
      _
    // Predicated region
    $region18: #{tpu_custom_call.1} parent=1 // pred_check
      _
    $region19: #{tpu_custom_call.1} parent=1 // pred_check_branch
      %63 = sbr.rel (0) target = $region21
    $region20: #{tpu_custom_call.1} parent=1 // pred_region
      _
    $region21: #{tpu_custom_call.1} parent=1 // pred_fallthru
      _
    // Predicated region
    $region22: #{tpu_custom_call.1} parent=1 // pred_check
      _
    $region23: #{tpu_custom_call.1} parent=1 // pred_check_branch
      %65 = sbr.rel (0) target = $region25
    $region24: #{tpu_custom_call.1} parent=1 // pred_region
      %67 = dma.done [#allocation3], 64
    $region25: #{tpu_custom_call.1} parent=1 // pred_fallthru
      _
    // Predicated region
    $region26: #{tpu_custom_call.1} parent=1 // pred_check
      _
    $region27: #{tpu_custom_call.1} parent=1 // pred_check_branch
      %69 = sbr.rel (0) target = $region29
    $region28: #{tpu_custom_call.1} parent=1 // pred_region
      %71 = dma.done [#allocation6], 64
    $region29: #{tpu_custom_call.1} parent=1 // pred_fallthru
      _
    // Predicated region
    $region30: #{tpu_custom_call.1} parent=1 // pred_check
      _
    $region31: #{tpu_custom_call.1} parent=1 // pred_check_branch
      %73 = sbr.rel (0) target = $region33
    $region32: #{tpu_custom_call.1} parent=1 // pred_region
      %75 = dma.done [#allocation6], 256
    $region33: #{tpu_custom_call.1} parent=1 // pred_fallthru
      _
    // Predicated region
    $region34: #{tpu_custom_call.1} parent=1 // pred_check
      _
    $region35: #{tpu_custom_call.1} parent=1 // pred_check_branch
      %77 = sbr.rel (0) target = $region37
    $region36: #{tpu_custom_call.1} parent=1 // pred_region
      %79 = dma.done [#allocation9], 128
    $region37: #{tpu_custom_call.1} parent=1 // pred_fallthru
      _
    %v81 = vld [vmem:[#allocation2] sm:$0xf]
    %v82 = vld [vmem:[#allocation7] sm:$0xf]
    %v83 = vld [vmem:[#allocation7 + $0x4] sm:$0xf]
    %v84 = vld [vmem:[#allocation7 + $0x8] sm:$0xf]
    %v85 = vld [vmem:[#allocation7 + $0xc] sm:$0xf]
    %v86 = vld [vmem:[#allocation5] sm:$0xf]
    %v87 = vld [vmem:[#allocation8] sm:$0xf]
    %v88 = vld [vmem:[#allocation8 + $0x4] sm:$0xf]
    %v91 = vunpack.c.l.b16 %v87
    %v92 = vunpack.c.l.b16 %v88
    %v93 = vpack.c.b16 %v92, %v91
    %vm95 = vcmask 130048
    %v97 = vsel %vm95, %v86, 0
    %99 = vmatpush.bf16.msra.mxu0 0
    %100 = vmatpush.bf16.msra.mxu0 0
    %101 = vmatpush.bf16.msra.mxu0 0
    %102 = vmatpush.bf16.msra.mxu0 0
    %103 = vmatpush.bf16.msra.mxu0 0
    %104 = vmatpush.bf16.msra.mxu0 0
    %105 = vmatpush.bf16.msra.mxu0 0
    %106 = vmatpush.bf16.msra.mxu0 %v93
    %107 = vmatmul.bf16.gmra.mxu0 %v97
    %v108 = vpop.f32.mrf.mxu0
    %v109 = vadd.f32 0.0, %v108
    %v110 = vpop.f32.mrf.mxu0
    %111 = vdwg.mxu0
    %v116 = vunpack.c.l.b16 %v82
    %v117 = vunpack.c.l.b16 %v83
    %v118 = vunpack.c.l.b16 %v84
    %v119 = vunpack.c.l.b16 %v85
    %v120 = vpack.c.b16 %v117, %v116
    %v121 = vpack.c.b16 %v119, %v118
    %vm124 = vcmask 261120
    %v126 = vsel %vm124, %v81, 0
    %128 = vmatpush.bf16.msra.mxu0 0
    %129 = vmatpush.bf16.msra.mxu0 0
    %130 = vmatpush.bf16.msra.mxu0 0
    %131 = vmatpush.bf16.msra.mxu0 0
    %132 = vmatpush.bf16.msra.mxu0 0
    %133 = vmatpush.bf16.msra.mxu0 0
    %134 = vmatpush.bf16.msra.mxu0 %v121
    %135 = vmatpush.bf16.msra.mxu0 %v120
    %136 = vmatmul.bf16.gmra.mxu0 %v126
    %v137 = vpop.f32.mrf.mxu0
    %v138 = vadd.f32 %v109, %v137
    %v139 = vpop.f32.mrf.mxu0
    %140 = vdwg.mxu0
    %v141 = vld [vmem:[%s4] sm:$0x1]
    %v143 = vperm.slane %v141, 0
    %v145 = vadd.f32 %v138, %v143
    %146 = vst [vmem:[#allocation10] sm:$0xff] %v145
    // Predicated region
    $region38: #{tpu_custom_call.1} parent=1 // pred_check
      _
    $region39: #{tpu_custom_call.1} parent=1 // pred_check_branch
      %148 = sbr.rel (0) target = $region41
    $region40: #{tpu_custom_call.1} parent=1 // pred_region
      %150 = vsyncadd [#allocation4], 0
      %s152 = sshll.u32 [#allocation10], 4
      %s153 = int_to_ptr.vmem [resolvable:$true] %s152
      %s154 = sshll.u32 %s5, 4
      %s155 = int_to_ptr.hbm [resolvable:$true] %s154
      %157 = dma.vmem_to_hbm [thread:$0]  %s153, 128, %s155, [#allocation4]
    $region41: #{tpu_custom_call.1} parent=1 // pred_fallthru
      _
    // Predicated region
    $region42: #{tpu_custom_call.1} parent=1 // pred_check
      _
    $region43: #{tpu_custom_call.1} parent=1 // pred_check_branch
      %159 = sbr.rel (0) target = $region45
    $region44: #{tpu_custom_call.1} parent=1 // pred_region
      %161 = dma.done [#allocation4], 128
    $region45: #{tpu_custom_call.1} parent=1 // pred_fallthru
      _
    %162 = vsyncpa [#allocation3], 1
    %163 = vsyncpa [#allocation6], 1
    %164 = vsyncpa [#allocation9], 1
    %165 = vsyncpa [#allocation4], 1

</llo_original>
